<compile_context>
chip_gen: v7x
topology: tpu7x:2x2x1
jax: 0.10.0
libtpu: 0.0.40
codegen_flags: <defaults>
</compile_context>

<pallas_src>
import jax
import jax.numpy as jnp
import numpy as np
from jax.experimental import pallas as pl
from jax.experimental.pallas import tpu as pltpu


# --------------------------------------------------------------------------- #
# Kernel bodies                                                               #
# --------------------------------------------------------------------------- #
def _attention_kernel_lanes(x_ref, w_ref, b_ref, mask_ref, out_ref, alpha_ref):
    """Batch-in-lanes kernel (TB is a multiple of 128).

    Block shapes:
      x_ref     (TB, S*F)  natural HBM layout, lane-dense load
      w_ref     (F, 1)     resident
      b_ref     (S, 1)     resident
      mask_ref  (S, TB)    mask^T (tiny, transposed outside)
      out_ref   (F, TB)    out^T  (transposed back outside)
      alpha_ref (S, TB)    alpha^T
    """
    TB = x_ref.shape[0]
    F = w_ref.shape[0]
    S = mask_ref.shape[0]

    x = x_ref[...].astype(jnp.float32)                    # (TB, S*F)
    w = w_ref[...].astype(jnp.float32)                    # (F, 1)
    b = b_ref[...].astype(jnp.float32)                    # (S, 1)
    mask = mask_ref[...].astype(jnp.float32)              # (S, TB)

    # Single in-kernel relayout (aligned f32 XLU transpose, hidden under DMA);
    # everything downstream is lane-dense in the batch dimension.
    xt = x.T.reshape(S, F, TB)                            # (S, F, TB)

    # e[s, b] = sum_f x[b, s, f] * w[f]  -- VPU multiply + sublane reduce.
    e = jnp.sum(xt * w.reshape(1, F, 1), axis=1)          # (S, TB)
    e = jnp.tanh(e + b)                                    # EUP
    alpha = jnp.exp(e) * mask                              # (S, TB)

    denom = jnp.sum(alpha, axis=0, keepdims=True)          # (1, TB)
    # eps added AFTER normalization, exactly like the PyTorch module.
    alpha = alpha * pl.reciprocal(denom, approx=False) + 1e-10
    alpha_ref[...] = alpha.astype(alpha_ref.dtype)         # lane-dense store

    # out[f, b] = sum_s x[b, s, f] * alpha[s, b]  -- VPU adds over S, no MXU.
    out = jnp.sum(xt * alpha.reshape(S, 1, TB), axis=0)    # (F, TB)
    out_ref[...] = out.astype(out_ref.dtype)                # lane-dense store


def _attention_kernel_rows(x_ref, w_ref, b_ref, mask_ref, out_ref, alpha_ref):
    """Small-batch fallback (single block, natural (B, S, F) layout)."""
    x = x_ref[...].astype(jnp.float32)                     # (B, S, F)
    w = w_ref[...].astype(jnp.float32)                     # (1, F)
    b = b_ref[...].astype(jnp.float32)                     # (1, S)
    mask = mask_ref[...].astype(jnp.float32)               # (B, S)

    e = jnp.sum(x * w.reshape(1, 1, -1), axis=-1)           # (B, S)
    e = jnp.tanh(e + b)
    alpha = jnp.exp(e) * mask
    denom = jnp.sum(alpha, axis=1, keepdims=True)
    alpha = alpha * pl.reciprocal(denom, approx=False) + 1e-10
    alpha_ref[...] = alpha.astype(alpha_ref.dtype)
    out = jnp.sum(x * alpha[:, :, None], axis=1)             # (B, F)
    out_ref[...] = out.astype(out_ref.dtype)


# --------------------------------------------------------------------------- #
# Wrapper                                                                     #
# --------------------------------------------------------------------------- #
def _pick_lane_tile(batch, row_bytes, target_block_bytes):
    """Batch tile: multiple of 128 (batch -> lanes), ~target bytes per block,
    and at least ~4 grid steps whenever the batch is large enough."""
    tb = max(128, (target_block_bytes // max(row_bytes, 1)) // 128 * 128)
    tiles128 = pl.cdiv(batch, 128)
    tb = min(tb, tiles128 * 128)                    # never exceed the batch
    tb = min(tb, max(128, (tiles128 // 4) * 128))   # keep >= ~4 steps if possible
    return int(tb)


def attention_forward(x, weight, bias, mask, *, batch_tile=None,
                      target_block_bytes=2 * 1024 * 1024):
    """x: (B,S,F), weight: (F,1), bias: (S,) or None, mask: (B,S).
    Returns (weighted_sequence (B,F), alpha (B,S))."""
    B, S, F = x.shape
    out_dtype = x.dtype
    if bias is None:
        bias = jnp.zeros((S,), dtype=jnp.float32)

    itemsize = jnp.dtype(x.dtype).itemsize
    cost = pl.CostEstimate(
        flops=4 * B * S * F,
        transcendentals=2 * B * S,
        bytes_accessed=int(B * S * F * itemsize
                           + B * S * jnp.dtype(mask.dtype).itemsize
                           + B * (S + F) * jnp.dtype(out_dtype).itemsize),
    )

    use_lanes = (B >= 128) and (F % 8 == 0)

    if use_lanes:
        row_bytes = S * F * itemsize
        TB = batch_tile if batch_tile is not None else _pick_lane_tile(
            B, row_bytes, target_block_bytes)
        TB = max(128, (TB // 128) * 128)
        grid = (pl.cdiv(B, TB),)          # ragged tail handled by Pallas (no padding)

        x2 = x.reshape(B, S * F)          # free view of contiguous x (no HBM pass)
        mask_t = jnp.transpose(mask)      # (S, B): tiny, native dtype
        w_col = weight.reshape(F, 1)
        b_col = bias.reshape(S, 1)

        out_t, alpha_t = pl.pallas_call(
            _attention_kernel_lanes,
            out_shape=(
                jax.ShapeDtypeStruct((F, B), out_dtype),
                jax.ShapeDtypeStruct((S, B), out_dtype),
            ),
            grid_spec=pltpu.PrefetchScalarGridSpec(
                num_scalar_prefetch=0,
                grid=grid,
                in_specs=[
                    pl.BlockSpec((TB, S * F), lambda i: (i, 0)),   # x (pipelined)
                    pl.BlockSpec((F, 1), lambda i: (0, 0)),        # weight (resident)
                    pl.BlockSpec((S, 1), lambda i: (0, 0)),        # bias (resident)
                    pl.BlockSpec((S, TB), lambda i: (0, i)),       # mask^T
                ],
                out_specs=(
                    pl.BlockSpec((F, TB), lambda i: (0, i)),       # out^T
                    pl.BlockSpec((S, TB), lambda i: (0, i)),       # alpha^T
                ),
            ),
            compiler_params=pltpu.CompilerParams(
                dimension_semantics=("parallel",),   # megacore split on v7x
                vmem_limit_bytes=32 * 1024 * 1024,   # v7x-safe; blocks are ~2 MiB
            ),
            cost_estimate=cost,
        )(x2, w_col, b_col, mask_t)

        return jnp.transpose(out_t), jnp.transpose(alpha_t)   # tiny transposes

    # ---- small-batch path: one block, natural layout, no relayouts ----------
    w_row = weight.reshape(1, F)
    b_row = bias.reshape(1, S)
    out, alpha = pl.pallas_call(
        _attention_kernel_rows,
        out_shape=(
            jax.ShapeDtypeStruct((B, F), out_dtype),
            jax.ShapeDtypeStruct((B, S), out_dtype),
        ),
        grid_spec=pltpu.PrefetchScalarGridSpec(
            num_scalar_prefetch=0,
            grid=(1,),
            in_specs=[
                pl.BlockSpec((B, S, F), lambda i: (0, 0, 0)),
                pl.BlockSpec((1, F), lambda i: (0, 0)),
                pl.BlockSpec((1, S), lambda i: (0, 0)),
                pl.BlockSpec((B, S), lambda i: (0, 0)),
            ],
            out_specs=(
                pl.BlockSpec((B, F), lambda i: (0, 0)),
                pl.BlockSpec((B, S), lambda i: (0, 0)),
            ),
        ),
        compiler_params=pltpu.CompilerParams(
            dimension_semantics=("arbitrary",),
            vmem_limit_bytes=32 * 1024 * 1024,
        ),
        cost_estimate=cost,
    )(x, w_row, b_row, mask)
    return out, alpha


# --------------------------------------------------------------------------- #
# Reference + self-test                                                       #
# --------------------------------------------------------------------------- #
def attention_reference(x, weight, bias, mask):
    B, S, F = x.shape
    e = (x.reshape(-1, F) @ weight).reshape(B, S) + bias[None, :]
    e = jnp.tanh(e)
    alpha = jnp.exp(e) * mask
    alpha = alpha / jnp.sum(alpha, axis=1, keepdims=True) + 1e-10
    return jnp.sum(x * alpha[:, :, None], axis=1), alpha


def _check(x, weight, bias, mask, **kw):
    out, alpha = attention_forward(x, weight, bias, mask, **kw)
    out = jax.block_until_ready(out)
    alpha = jax.block_until_ready(alpha)
    out_ref, alpha_ref = attention_reference(
        x.astype(jnp.float32), weight, bias, mask.astype(jnp.float32))
    np.testing.assert_allclose(np.asarray(out, np.float32), np.asarray(out_ref),
                               atol=1e-5, rtol=1e-5)
    np.testing.assert_allclose(np.asarray(alpha, np.float32), np.asarray(alpha_ref),
                               atol=1e-5, rtol=1e-5)


if __name__ == "__main__":
    S, F = 8, 32  # seq_len, feature_size

    key = jax.random.PRNGKey(0)
    kx, kw, kb, km, kx2, km2, kx3, km3, kx4, km4 = jax.random.split(key, 10)

    # Mirrors nn.init.xavier_uniform_ on (F, 1): bound = sqrt(6 / (F + 1)).
    bound = float(np.sqrt(6.0 / (F + 1)))
    weight = jax.random.uniform(kw, (F, 1), minval=-bound, maxval=bound,
                                dtype=jnp.float32)
    bias = 0.1 * jax.random.normal(kb, (S,), dtype=jnp.float32)

    def make_inputs(kx_, km_, B_):
        x_ = jax.random.normal(kx_, (B_, S, F), dtype=jnp.float32)
        m_ = (jax.random.uniform(km_, (B_, S)) > 0.3).astype(jnp.float32)
        m_ = m_.at[:, 0].set(1.0)       # at least one active position per row
        return x_, m_

    # 1) tiny batch -> small-batch path (single block, natural layout)
    x1, m1 = make_inputs(kx, km, 2)
    _check(x1, weight, bias, m1)

    # 2) small batch -> small-batch path
    x2, m2 = make_inputs(kx2, km2, 20)
    _check(x2, weight, bias, m2)

    # 3) real batch -> batch-in-lanes path, TB=128, grid=4, evenly divisible
    x3, m3 = make_inputs(kx3, km3, 512)
    _check(x3, weight, bias, m3)

    # 4) ragged batch -> batch-in-lanes path, TB=128, grid=3, uneven last block
    x4, m4 = make_inputs(kx4, km4, 300)
    _check(x4, weight, bias, m4)

    print("KERNEL_OK")
</pallas_src>

<mosaic_0001>
module attributes {stable_mosaic.version = 11 : i64} {
  func.func @_attention_kernel_rows(%arg0: i32, %arg1: memref<2x8x32xf32, #tpu.memory_space<vmem>>, %arg2: memref<1x32xf32, #tpu.memory_space<vmem>>, %arg3: memref<1x8xf32, #tpu.memory_space<vmem>>, %arg4: memref<2x8xf32, #tpu.memory_space<vmem>>, %arg5: memref<2x32xf32, #tpu.memory_space<vmem>>, %arg6: memref<2x8xf32, #tpu.memory_space<vmem>>) attributes {dimension_semantics = [#tpu.dimension_semantics<arbitrary>], iteration_bounds = array<i64: 1>, scalar_prefetch = 0 : i64, scratch_operands = 0 : i64, tpu.core_type = #tpu.core_type<tc>, window_params = [{pipeline_mode = #tpu.pipeline_mode<synchronous>, transform_indices = @transform_0, window_bounds = array<i64: 2, 8, 32>}, {pipeline_mode = #tpu.pipeline_mode<synchronous>, transform_indices = @transform_1, window_bounds = array<i64: 1, 32>}, {pipeline_mode = #tpu.pipeline_mode<synchronous>, transform_indices = @transform_2, window_bounds = array<i64: 1, 8>}, {pipeline_mode = #tpu.pipeline_mode<synchronous>, transform_indices = @transform_3, window_bounds = array<i64: 2, 8>}, {pipeline_mode = #tpu.pipeline_mode<synchronous>, transform_indices = @transform_4, window_bounds = array<i64: 2, 32>}, {pipeline_mode = #tpu.pipeline_mode<synchronous>, transform_indices = @transform_5, window_bounds = array<i64: 2, 8>}]} {
    %c0 = arith.constant 0 : index
    %c0_0 = arith.constant 0 : index
    %c0_1 = arith.constant 0 : index
    %0 = vector.load %arg1[%c0, %c0_0, %c0_1] : memref<2x8x32xf32, #tpu.memory_space<vmem>>, vector<2x8x32xf32>
    %c0_2 = arith.constant 0 : index
    %c0_3 = arith.constant 0 : index
    %1 = vector.load %arg2[%c0_2, %c0_3] : memref<1x32xf32, #tpu.memory_space<vmem>>, vector<1x32xf32>
    %c0_4 = arith.constant 0 : index
    %c0_5 = arith.constant 0 : index
    %2 = vector.load %arg3[%c0_4, %c0_5] : memref<1x8xf32, #tpu.memory_space<vmem>>, vector<1x8xf32>
    %c0_6 = arith.constant 0 : index
    %c0_7 = arith.constant 0 : index
    %3 = vector.load %arg4[%c0_6, %c0_7] : memref<2x8xf32, #tpu.memory_space<vmem>>, vector<2x8xf32>
    %4 = vector.shape_cast %1 : vector<1x32xf32> to vector<1x1x32xf32>
    %5 = vector.broadcast %4 : vector<1x1x32xf32> to vector<2x8x32xf32>
    %6 = arith.mulf %0, %5 : vector<2x8x32xf32>
    %cst = arith.constant dense<0.000000e+00> : vector<2x8xf32>
    %7 = vector.multi_reduction <add>, %6, %cst [2] : vector<2x8x32xf32> to vector<2x8xf32>
    %8 = vector.broadcast %2 : vector<1x8xf32> to vector<2x8xf32>
    %9 = arith.addf %7, %8 : vector<2x8xf32>
    %10 = math.tanh %9 : vector<2x8xf32>
    %11 = math.exp %10 : vector<2x8xf32>
    %12 = arith.mulf %11, %3 : vector<2x8xf32>
    %cst_8 = arith.constant dense<0.000000e+00> : vector<2xf32>
    %13 = vector.multi_reduction <add>, %12, %cst_8 [1] : vector<2x8xf32> to vector<2xf32>
    %14 = vector.shape_cast %13 : vector<2xf32> to vector<2x1xf32>
    %15 = tpu.reciprocal %14 : vector<2x1xf32> -> vector<2x1xf32>
    %16 = vector.broadcast %15 : vector<2x1xf32> to vector<2x8xf32>
    %17 = arith.mulf %12, %16 : vector<2x8xf32>
    %cst_9 = arith.constant 1.000000e-10 : f32
    %18 = vector.broadcast %cst_9 : f32 to vector<2x8xf32>
    %19 = arith.addf %17, %18 : vector<2x8xf32>
    %c0_10 = arith.constant 0 : index
    %c0_11 = arith.constant 0 : index
    %20 = vector.load %arg6[%c0_10, %c0_11] : memref<2x8xf32, #tpu.memory_space<vmem>>, vector<2x8xf32>
    tpu.vector_store %arg6[%c0_10, %c0_11], %19 {strides = array<i32>} : memref<2x8xf32, #tpu.memory_space<vmem>>, vector<2x8xf32>,
    %21 = vector.shape_cast %19 : vector<2x8xf32> to vector<2x8x1xf32>
    %22 = vector.broadcast %21 : vector<2x8x1xf32> to vector<2x8x32xf32>
    %23 = arith.mulf %0, %22 : vector<2x8x32xf32>
    %cst_12 = arith.constant dense<0.000000e+00> : vector<2x32xf32>
    %24 = vector.multi_reduction <add>, %23, %cst_12 [1] : vector<2x8x32xf32> to vector<2x32xf32>
    %c0_13 = arith.constant 0 : index
    %c0_14 = arith.constant 0 : index
    %25 = vector.load %arg5[%c0_13, %c0_14] : memref<2x32xf32, #tpu.memory_space<vmem>>, vector<2x32xf32>
    tpu.vector_store %arg5[%c0_13, %c0_14], %24 {strides = array<i32>} : memref<2x32xf32, #tpu.memory_space<vmem>>, vector<2x32xf32>,
    return
  }
  func.func @transform_0(%arg0: i32) -> (i32, i32, i32) {
    %c0_i32 = arith.constant 0 : i32
    %c0_i32_0 = arith.constant 0 : i32
    %c0_i32_1 = arith.constant 0 : i32
    %c0_i32_2 = arith.constant 0 : i32
    return %c0_i32, %c0_i32_0, %c0_i32_1 : i32, i32, i32
  }
  func.func @transform_1(%arg0: i32) -> (i32, i32) {
    %c0_i32 = arith.constant 0 : i32
    %c0_i32_0 = arith.constant 0 : i32
    %c0_i32_1 = arith.constant 0 : i32
    return %c0_i32, %c0_i32_0 : i32, i32
  }
  func.func @transform_2(%arg0: i32) -> (i32, i32) {
    %c0_i32 = arith.constant 0 : i32
    %c0_i32_0 = arith.constant 0 : i32
    %c0_i32_1 = arith.constant 0 : i32
    return %c0_i32, %c0_i32_0 : i32, i32
  }
  func.func @transform_3(%arg0: i32) -> (i32, i32) {
    %c0_i32 = arith.constant 0 : i32
    %c0_i32_0 = arith.constant 0 : i32
    %c0_i32_1 = arith.constant 0 : i32
    return %c0_i32, %c0_i32_0 : i32, i32
  }
  func.func @transform_4(%arg0: i32) -> (i32, i32) {
    %c0_i32 = arith.constant 0 : i32
    %c0_i32_0 = arith.constant 0 : i32
    %c0_i32_1 = arith.constant 0 : i32
    return %c0_i32, %c0_i32_0 : i32, i32
  }
  func.func @transform_5(%arg0: i32) -> (i32, i32) {
    %c0_i32 = arith.constant 0 : i32
    %c0_i32_0 = arith.constant 0 : i32
    %c0_i32_1 = arith.constant 0 : i32
    return %c0_i32, %c0_i32_0 : i32, i32
  }
}

</mosaic_0001>

<llo_original>
// kernel: tpu_custom_call.1
$region0: #{tpu_custom_call.1}
  #allocation0 [shape = 'u32[]', space=smem, size = 0x4, offset = 0x4, fixed_abs, tag = 'smem constant byte address 0x4 - core index']
  #allocation1 [shape = 'u32[144,128]{1,0:T(1,128)}', space=vmem, size = 0x12000, scoped, tag = 'internal scratch']
  %s0 = inlined_call_operand.hbm [shape: f32[2,8,32], index: 0, kind: input, shape index: {}]
  %s1 = inlined_call_operand.vmem [shape: f32[1,32], index: 1, kind: input, shape index: {}]
  %s2 = inlined_call_operand.vmem [shape: f32[1,8], index: 2, kind: input, shape index: {}]
  %s3 = inlined_call_operand.vmem [shape: f32[2,8], index: 3, kind: input, shape index: {}]
  %s4 = inlined_call_operand.hbm [shape: f32[2,32], index: 4, kind: output, shape index: {0}]
  %s5 = inlined_call_operand.hbm [shape: f32[2,8], index: 5, kind: output, shape index: {1}]
  %6 = xla_tuple %s4, %s5
  %s7 = sld [smem:[#allocation0]]
  $region38: #{tpu_custom_call.1} parent=0
    _
  %s9 = ssub.s32 1, %s7
  %s10 = scalar_select 0, %s9, %s7
  $region1: #{tpu_custom_call.1} parent=0
    #allocation2 [shape = 'u8[8192]{0}', space=vmem, size = 0x2000, scoped, tag = 'input window, operand 0, single buffered']
    #allocation3 [shape = 's32[1]{0}', space=sflag, size = 0x4, scoped, tag = 'scoped memory for tpu_custom_call.1']
    #allocation4 [shape = 's32[1]{0}', space=sflag, size = 0x4, scoped, tag = 'scoped memory for tpu_custom_call.1']
    #allocation5 [shape = 'u8[1024]{0}', space=vmem, size = 0x400, scoped, tag = 'output window, operand 0, single buffered']
    #allocation6 [shape = 'u8[1024]{0}', space=vmem, size = 0x400, scoped, tag = 'output window, operand 1, single buffered']
    #allocation7 [shape = 's32[1]{0}', space=sflag, size = 0x4, scoped, tag = 'scoped memory for tpu_custom_call.1']
    %11 = vsyncpa [#allocation3], 0
    %12 = vsyncpa [#allocation4], 0
    %13 = vsyncpa [#allocation7], 0
    // Predicated region
    $region2: #{tpu_custom_call.1} parent=1 // pred_check
      _
    $region3: #{tpu_custom_call.1} parent=1 // pred_check_branch
      %15 = sbr.rel (0) target = $region5
    $region4: #{tpu_custom_call.1} parent=1 // pred_region
      %s17 = ssub.s32 256, 256
      %18 = vsyncadd [#allocation3], %s17
      %s19 = sshll.u32 [#allocation2], 4
      %s20 = int_to_ptr.vmem [resolvable:$true] %s19
      %25 = dma.hbm_to_vmem [thread:$0]  %s0, 256, %s20, [#allocation3], 128, 128, 8
    $region5: #{tpu_custom_call.1} parent=1 // pred_fallthru
      _
    // Predicated region
    $region6: #{tpu_custom_call.1} parent=1 // pred_check
      _
    $region7: #{tpu_custom_call.1} parent=1 // pred_check_branch
      %27 = sbr.rel (0) target = $region9
    $region8: #{tpu_custom_call.1} parent=1 // pred_region
      _
    $region9: #{tpu_custom_call.1} parent=1 // pred_fallthru
      _
    // Predicated region
    $region10: #{tpu_custom_call.1} parent=1 // pred_check
      _
    $region11: #{tpu_custom_call.1} parent=1 // pred_check_branch
      %29 = sbr.rel (0) target = $region13
    $region12: #{tpu_custom_call.1} parent=1 // pred_region
      _
    $region13: #{tpu_custom_call.1} parent=1 // pred_fallthru
      _
    // Predicated region
    $region14: #{tpu_custom_call.1} parent=1 // pred_check
      _
    $region15: #{tpu_custom_call.1} parent=1 // pred_check_branch
      %31 = sbr.rel (0) target = $region17
    $region16: #{tpu_custom_call.1} parent=1 // pred_region
      _
    $region17: #{tpu_custom_call.1} parent=1 // pred_fallthru
      _
    // Predicated region
    $region18: #{tpu_custom_call.1} parent=1 // pred_check
      _
    $region19: #{tpu_custom_call.1} parent=1 // pred_check_branch
      %33 = sbr.rel (0) target = $region21
    $region20: #{tpu_custom_call.1} parent=1 // pred_region
      %34 = dma.done [#allocation3], 256
    $region21: #{tpu_custom_call.1} parent=1 // pred_fallthru
      _
    %v35 = vld [vmem:[#allocation2] sm:$0xff]
    %v36 = vld [vmem:[#allocation2 + $0x8] sm:$0xff]
    %v37 = vld [vmem:[%s1] sm:$0x1]
    %v38 = vld [vmem:[%s2] sm:$0x1]
    %v39 = vld [vmem:[%s3] sm:$0x3]
    %v41 = vlaneseq
    %v42 = vshrl.u32 %v41, 7
    %v43 = vsub.s32 0, %v42
    %v44 = vrot.slane %v37, %v43
    %v46 = vmul.f32 %v35, %v44
    %v47 = vmul.f32 %v36, %v44
    %vm48 = vcmask 261120
    %v49 = vsel %vm48, %v46, 0.0
    %50 = vadd.xlane.f32.xlu0 %v49
    %v51 = vpop.xlane.xlu0 %50
    %v52 = vsel %vm48, %v47, 0.0
    %53 = vadd.xlane.f32.xlu0 %v52
    %v54 = vpop.xlane.xlu0 %53
    %v56 = vlaneseq
    %v57 = vshrl.u32 %v56, 7
    %v58 = vsub.s32 0, %v57
    %v59 = vrot.slane %v38, %v58
    %61 = vbcast.lane.b32.xlu0 %v59, 256
    %v62 = vpop.permute.xlu0 %61
    %v64 = vadd.f32 %v51, %v62
    %v65 = vadd.f32 %v54, %v62
    %v66 = vtanh.pop %v64
    %v67 = vtanh.pop %v65
    %v68 = vmul.f32 %v66, 1.442695
    %v69 = vpow.pop %v68
    %v70 = vmul.f32 %v67, 1.442695
    %v71 = vpow.pop %v70
    %v73 = vlaneseq
    %v74 = vshrl.u32 %v73, 7
    %v75 = vsub.s32 0, %v74
    %v76 = vrot.slane %v39, %v75
    %78 = vbcast.lane.b32.xlu0 %v76, 256
    %v79 = vpop.permute.xlu0 %78
    %v80 = vlaneseq
    %v81 = vshrl.u32 %v80, 7
    %v82 = vsub.s32 1, %v81
    %v83 = vrot.slane %v39, %v82
    %85 = vbcast.lane.b32.xlu0 %v83, 256
    %v86 = vpop.permute.xlu0 %85
    %v89 = vmul.f32 %v69, %v79
    %v90 = vmul.f32 %v71, %v86
    %93 = vset.pattern.permute.xlu0 0
    %94 = vperm.xlu0 %93, %v89
    %v95 = vpop.permute.xlu0 %94
    %96 = vset.pattern.permute.xlu0 0
    %97 = vperm.xlu0 %96, %v90
    %v98 = vpop.permute.xlu0 %97
    %v99 = vlaneseq
    %v100 = vand.u32 %v99, 127
    %v101 = vlaneseq
    %v102 = vshrl.u32 %v101, 7
    %v103 = vsub.s32 %v100, %v102
    %v104 = vrot.slane %v95, %v103
    %v105 = vlaneseq
    %v106 = vshrl.u32 %v105, 7
    %v107 = vsub.s32 %v100, %v106
    %v108 = vrot.slane %v98, %v107
    %vm109 = vcmask 1041409
    %v110 = vsel %vm109, %v108, %v104
    %vm112 = vcmask 58368
    %v113 = vsel %vm112, %v110, 0.0
    %114 = vadd.xlane.f32.xlu0 %v113
    %v115 = vpop.xlane.xlu0 %114
    %v116 = vrcp.pop %v115
    %v118 = vlaneseq
    %v119 = vshrl.u32 %v118, 7
    %v120 = vsub.s32 0, %v119
    %v121 = vrot.slane %v116, %v120
    %v122 = vlaneseq
    %v123 = vshrl.u32 %v122, 7
    %v124 = vsub.s32 1, %v123
    %v125 = vrot.slane %v116, %v124
    %v128 = vmul.f32 %v89, %v121
    %v129 = vmul.f32 %v90, %v125
    %v130 = vadd.f32 %v128, 1e-10
    %v131 = vadd.f32 %v129, 1e-10
    %134 = vset.pattern.permute.xlu0 0
    %135 = vperm.xlu0 %134, %v130
    %v136 = vpop.permute.xlu0 %135
    %137 = vset.pattern.permute.xlu0 0
    %138 = vperm.xlu0 %137, %v131
    %v139 = vpop.permute.xlu0 %138
    %v140 = vlaneseq
    %v141 = vshrl.u32 %v140, 7
    %v142 = vsub.s32 %v100, %v141
    %v143 = vrot.slane %v136, %v142
    %v144 = vlaneseq
    %v145 = vshrl.u32 %v144, 7
    %v146 = vsub.s32 %v100, %v145
    %v147 = vrot.slane %v139, %v146
    %v148 = vsel %vm109, %v147, %v143
    %150 = vst.msk [vmem:[#allocation6] sm:$0x3] %vm112, %v148
    %v153 = vmul.f32 %v35, %v136
    %v154 = vmul.f32 %v36, %v139
    %v155 = vsel %vm48, %v153, 0.0
    %v156 = vrot.slane %v155, 4
    %v157 = vadd.f32 %v155, %v156
    %v158 = vrot.slane %v157, 2
    %v159 = vadd.f32 %v157, %v158
    %v160 = vrot.slane %v159, 1
    %v161 = vadd.f32 %v159, %v160
    %v162 = vsel %vm48, %v154, 0.0
    %v163 = vrot.slane %v162, 4
    %v164 = vadd.f32 %v162, %v163
    %v165 = vrot.slane %v164, 2
    %v166 = vadd.f32 %v164, %v165
    %v167 = vrot.slane %v166, 1
    %v168 = vadd.f32 %v166, %v167
    %v171 = vsel %vm109, %v168, %v161
    %vm173 = vcmask 254976
    %174 = vst.msk [vmem:[#allocation5] sm:$0x3] %vm173, %v171
    // Predicated region
    $region22: #{tpu_custom_call.1} parent=1 // pred_check
      _
    $region23: #{tpu_custom_call.1} parent=1 // pred_check_branch
      %176 = sbr.rel (0) target = $region25
    $region24: #{tpu_custom_call.1} parent=1 // pred_region
      %s178 = ssub.s32 32, 32
      %179 = vsyncadd [#allocation4], %s178
      %s181 = sshll.u32 [#allocation5], 4
      %s182 = int_to_ptr.vmem [resolvable:$true] %s181
      %184 = dma.vmem_to_hbm [thread:$0]  %s182, 32, %s4, [#allocation4]
    $region25: #{tpu_custom_call.1} parent=1 // pred_fallthru
      _
    // Predicated region
    $region26: #{tpu_custom_call.1} parent=1 // pred_check
      _
    $region27: #{tpu_custom_call.1} parent=1 // pred_check_branch
      %186 = sbr.rel (0) target = $region29
    $region28: #{tpu_custom_call.1} parent=1 // pred_region
      %s188 = ssub.s32 32, 32
      %189 = vsyncadd [#allocation7], %s188
      %s191 = sshll.u32 [#allocation6], 4
      %s192 = int_to_ptr.vmem [resolvable:$true] %s191
      %194 = dma.vmem_to_hbm [thread:$0]  %s192, 32, %s5, [#allocation7]
    $region29: #{tpu_custom_call.1} parent=1 // pred_fallthru
      _
    // Predicated region
    $region30: #{tpu_custom_call.1} parent=1 // pred_check
      _
    $region31: #{tpu_custom_call.1} parent=1 // pred_check_branch
      %196 = sbr.rel (0) target = $region33
    $region32: #{tpu_custom_call.1} parent=1 // pred_region
      %197 = dma.done [#allocation4], 32
    $region33: #{tpu_custom_call.1} parent=1 // pred_fallthru
      _
    // Predicated region
    $region34: #{tpu_custom_call.1} parent=1 // pred_check
      _
    $region35: #{tpu_custom_call.1} parent=1 // pred_check_branch
      %199 = sbr.rel (0) target = $region37
    $region36: #{tpu_custom_call.1} parent=1 // pred_region
      %200 = dma.done [#allocation7], 32
    $region37: #{tpu_custom_call.1} parent=1 // pred_fallthru
      _
    %201 = vsyncpa [#allocation3], 1
    %202 = vsyncpa [#allocation4], 1
    %203 = vsyncpa [#allocation7], 1

</llo_original>
